<compile_context>
chip_gen: v6e
topology: v6e:2x2x1
jax: 0.10.0
libtpu: 0.0.40
codegen_flags: <defaults>
</compile_context>

<pallas_src>
import functools

import jax
import jax.numpy as jnp
from jax.experimental import pallas as pl
from jax.experimental.pallas import tpu as pltpu

LANE = 128
DEFAULT_BLOCK_ROWS = 2048  # (2048, 128) f32 tile = 1 MiB per pipeline buffer


def _sublane_multiple(dtype):
    # Sublane packing per 32-bit word: f32 -> 8, bf16/f16 -> 16, int8/fp8 -> 32.
    return 8 * (4 // jnp.dtype(dtype).itemsize)


def _mse_partial_kernel(pred_ref, target_ref, out_ref, *, rows, block_rows,
                        nb_per_core, need_mask):
    c = pl.program_id(0)   # core (parallel) axis
    i = pl.program_id(1)   # reduction (arbitrary) axis

    @pl.when(i == 0)
    def _():
        out_ref[...] = jnp.zeros_like(out_ref)

    d = pred_ref[...].astype(jnp.float32) - target_ref[...].astype(jnp.float32)
    sq = d * d

    if need_mask:
        # Rows past the true row count are Pallas block padding (or a clamped
        # duplicate block); their contents are undefined -> select them to 0.
        row0 = (c * nb_per_core + i) * block_rows
        rid = row0 + jax.lax.broadcasted_iota(jnp.int32, sq.shape, 0)
        sq = jnp.where(rid < rows, sq, 0.0)

    # Fold the block into an (8, 128) vreg-shaped partial sum (VPU adds only).
    partial = jnp.sum(sq.reshape(block_rows // 8, 8, LANE), axis=0)
    out_ref[...] += partial[None, :, :]


def mse_loss(pred, target, block_rows=DEFAULT_BLOCK_ROWS):
    assert pred.shape == target.shape, "pred/target shape mismatch"
    n = int(pred.size)
    assert n > 0, "mse_loss of an empty tensor"

    def prep(x):
        if jnp.dtype(x.dtype).itemsize not in (1, 2, 4):
            x = x.astype(jnp.float32)  # non-TPU-native width (e.g. f64)
        flat = x.reshape(-1)
        pad = (-n) % LANE
        if pad:  # rare: <128 zeros so the (rows, 128) reshape is legal
            flat = jnp.pad(flat, (0, pad))
        return flat.reshape(-1, LANE)

    p2 = prep(pred)
    t2 = prep(target)
    rows = p2.shape[0]

    sub = max(_sublane_multiple(p2.dtype), _sublane_multiple(t2.dtype))
    br = min(int(block_rows), rows)
    br = max(sub, ((br + sub - 1) // sub) * sub)  # sublane-aligned, >= 1 tile

    nb = pl.cdiv(rows, br)          # row-blocks of real data
    n_cores = 2 if nb > 1 else 1    # megacore split (helps v7x; free elsewhere)
    nbpc = pl.cdiv(nb, n_cores)
    need_mask = (rows % br != 0) or (nbpc * n_cores != nb)

    def in_map(c, i):
        # Clamp so the DMA never walks past the last real block; the in-kernel
        # row mask zeroes any duplicated / padded rows.
        return (jnp.minimum(c * nbpc + i, nb - 1), 0)

    kernel = functools.partial(_mse_partial_kernel, rows=rows, block_rows=br,
                               nb_per_core=nbpc, need_mask=need_mask)

    bytes_accessed = (p2.size * p2.dtype.itemsize
                      + t2.size * t2.dtype.itemsize
                      + n_cores * 8 * LANE * 4)

    partials = pl.pallas_call(
        kernel,
        out_shape=jax.ShapeDtypeStruct((n_cores, 8, LANE), jnp.float32),
        grid_spec=pltpu.PrefetchScalarGridSpec(
            num_scalar_prefetch=0,
            grid=(n_cores, nbpc),
            in_specs=[
                pl.BlockSpec((br, LANE), in_map),
                pl.BlockSpec((br, LANE), in_map),
            ],
            out_specs=pl.BlockSpec((1, 8, LANE), lambda c, i: (c, 0, 0)),
        ),
        compiler_params=pltpu.CompilerParams(
            dimension_semantics=("parallel", "arbitrary")),
        cost_estimate=pl.CostEstimate(
            flops=3 * n, transcendentals=0,
            bytes_accessed=int(bytes_accessed)),
    )(p2, t2)

    # Tiny final reduce + mean in the wrapper (n is static at trace time).
    return (jnp.sum(partials) * (1.0 / n)).astype(pred.dtype)


if __name__ == "__main__":
    key = jax.random.PRNGKey(0)
    k1, k2, k3, k4 = jax.random.split(key, 4)

    loss_fn = jax.jit(mse_loss)

    # Primary: dynamics-predictor style NCHW prediction, f32.
    pred = jax.random.normal(k1, (2, 4, 16, 16), dtype=jnp.float32)
    target = jax.random.normal(k2, (2, 4, 16, 16), dtype=jnp.float32)
    loss = loss_fn(pred, target)
    jax.block_until_ready(loss)
    ref = jnp.mean((pred - target) ** 2)
    assert jnp.allclose(loss, ref, rtol=1e-5, atol=1e-6), (loss, ref)

    # Ragged element count (exercises the tail-row mask path).
    p_odd = jax.random.normal(k3, (3, 5, 7), dtype=jnp.float32)
    t_odd = jax.random.normal(k4, (3, 5, 7), dtype=jnp.float32)
    loss_odd = loss_fn(p_odd, t_odd)
    jax.block_until_ready(loss_odd)
    ref_odd = jnp.mean((p_odd - t_odd) ** 2)
    assert jnp.allclose(loss_odd, ref_odd, rtol=1e-5, atol=1e-6), (loss_odd, ref_odd)

    # bf16 inputs are streamed in native dtype and accumulated in f32.
    p_bf = jax.random.normal(k1, (4, 8, 64), dtype=jnp.float32).astype(jnp.bfloat16)
    t_bf = jax.random.normal(k2, (4, 8, 64), dtype=jnp.float32).astype(jnp.bfloat16)
    loss_bf = loss_fn(p_bf, t_bf)
    jax.block_until_ready(loss_bf)
    ref_bf = jnp.mean((p_bf.astype(jnp.float32) - t_bf.astype(jnp.float32)) ** 2)
    assert jnp.allclose(loss_bf.astype(jnp.float32), ref_bf,
                        rtol=2e-2, atol=2e-2), (loss_bf, ref_bf)

    print("KERNEL_OK")
</pallas_src>

<mosaic_0001>
module attributes {stable_mosaic.version = 11 : i64} {
  func.func @_mse_partial_kernel(%arg0: i32, %arg1: i32, %arg2: memref<16x128xf32, #tpu.memory_space<vmem>>, %arg3: memref<16x128xf32, #tpu.memory_space<vmem>>, %arg4: memref<1x8x128xf32, #tpu.memory_space<vmem>>) attributes {dimension_semantics = [#tpu.dimension_semantics<parallel>, #tpu.dimension_semantics<arbitrary>], iteration_bounds = array<i64: 1, 1>, scalar_prefetch = 0 : i64, scratch_operands = 0 : i64, tpu.core_type = #tpu.core_type<tc>, window_params = [{transform_indices = @transform_0, window_bounds = array<i64: 16, 128>}, {transform_indices = @transform_1, window_bounds = array<i64: 16, 128>}, {transform_indices = @transform_2, window_bounds = array<i64: 1, 8, 128>}]} {
    %c0_i32 = arith.constant 0 : i32
    %0 = arith.cmpi eq, %arg1, %c0_i32 : i32
    %1 = arith.extui %0 : i1 to i32
    %c0_i32_0 = arith.constant 0 : i32
    %2 = arith.cmpi ne, %1, %c0_i32_0 : i32
    scf.if %2 {
      %cst_10 = arith.constant 0.000000e+00 : f32
      %13 = vector.broadcast %cst_10 : f32 to vector<1x8x128xf32>
      %c0_11 = arith.constant 0 : index
      %c0_12 = arith.constant 0 : index
      %c0_13 = arith.constant 0 : index
      %14 = vector.load %arg4[%c0_11, %c0_12, %c0_13] : memref<1x8x128xf32, #tpu.memory_space<vmem>>, vector<1x8x128xf32>
      tpu.vector_store %arg4[%c0_11, %c0_12, %c0_13], %13 {strides = array<i32>} : memref<1x8x128xf32, #tpu.memory_space<vmem>>, vector<1x8x128xf32>,
    } else {
    }
    %c0 = arith.constant 0 : index
    %c0_1 = arith.constant 0 : index
    %3 = vector.load %arg2[%c0, %c0_1] : memref<16x128xf32, #tpu.memory_space<vmem>>, vector<16x128xf32>
    %c0_2 = arith.constant 0 : index
    %c0_3 = arith.constant 0 : index
    %4 = vector.load %arg3[%c0_2, %c0_3] : memref<16x128xf32, #tpu.memory_space<vmem>>, vector<16x128xf32>
    %5 = arith.subf %3, %4 : vector<16x128xf32>
    %6 = arith.mulf %5, %5 : vector<16x128xf32>
    %7 = vector.shape_cast %6 : vector<16x128xf32> to vector<2x8x128xf32>
    %cst = arith.constant dense<0.000000e+00> : vector<8x128xf32>
    %8 = vector.multi_reduction <add>, %7, %cst [0] : vector<2x8x128xf32> to vector<8x128xf32>
    %c0_4 = arith.constant 0 : index
    %c0_5 = arith.constant 0 : index
    %c0_6 = arith.constant 0 : index
    %9 = vector.load %arg4[%c0_4, %c0_5, %c0_6] : memref<1x8x128xf32, #tpu.memory_space<vmem>>, vector<1x8x128xf32>
    %10 = vector.shape_cast %8 : vector<8x128xf32> to vector<1x8x128xf32>
    %11 = arith.addf %9, %10 : vector<1x8x128xf32>
    %c0_7 = arith.constant 0 : index
    %c0_8 = arith.constant 0 : index
    %c0_9 = arith.constant 0 : index
    %12 = vector.load %arg4[%c0_7, %c0_8, %c0_9] : memref<1x8x128xf32, #tpu.memory_space<vmem>>, vector<1x8x128xf32>
    tpu.vector_store %arg4[%c0_7, %c0_8, %c0_9], %11 {strides = array<i32>} : memref<1x8x128xf32, #tpu.memory_space<vmem>>, vector<1x8x128xf32>,
    return
  }
  func.func @transform_0(%arg0: i32, %arg1: i32) -> (i32, i32) {
    %c1_i32 = arith.constant 1 : i32
    %0 = arith.muli %arg0, %c1_i32 : i32
    %1 = arith.addi %0, %arg1 : i32
    %c0_i32 = arith.constant 0 : i32
    %2 = arith.minsi %1, %c0_i32 : i32
    %c0_i32_0 = arith.constant 0 : i32
    %c0_i32_1 = arith.constant 0 : i32
    return %2, %c0_i32_0 : i32, i32
  }
  func.func @transform_1(%arg0: i32, %arg1: i32) -> (i32, i32) {
    %c1_i32 = arith.constant 1 : i32
    %0 = arith.muli %arg0, %c1_i32 : i32
    %1 = arith.addi %0, %arg1 : i32
    %c0_i32 = arith.constant 0 : i32
    %2 = arith.minsi %1, %c0_i32 : i32
    %c0_i32_0 = arith.constant 0 : i32
    %c0_i32_1 = arith.constant 0 : i32
    return %2, %c0_i32_0 : i32, i32
  }
  func.func @transform_2(%arg0: i32, %arg1: i32) -> (i32, i32, i32) {
    %c0_i32 = arith.constant 0 : i32
    %c0_i32_0 = arith.constant 0 : i32
    %c0_i32_1 = arith.constant 0 : i32
    return %arg0, %c0_i32, %c0_i32_0 : i32, i32, i32
  }
}

</mosaic_0001>

<llo_original>
// kernel: mse_loss.1
$region0: #{mse_loss.1}
  #allocation0 [shape = 'u32[]', space=smem, size = 0x4, offset = 0x4, fixed_abs, tag = 'smem constant byte address 0x4 - core index']
  #allocation1 [shape = 'u32[144,128]{1,0:T(1,128)}', space=vmem, size = 0x12000, scoped, tag = 'internal scratch']
  %s0 = inlined_call_operand.vmem [shape: f32[16,128], index: 0, kind: input, shape index: {}]
  %s1 = inlined_call_operand.vmem [shape: f32[16,128], index: 1, kind: input, shape index: {}]
  %s2 = inlined_call_operand.vmem [shape: f32[1,8,128], index: 2, kind: output, shape index: {}]
  %s3 = sld [smem:[#allocation0]]
  $region22: #{mse_loss.1} parent=0
    _
  %s5 = ssub.s32 1, %s3
  %s6 = scalar_select 0, %s5, %s3
  // Predicated region
  $region2: #{mse_loss.1} parent=0 // pred_check
    _
  $region3: #{mse_loss.1} parent=0 // pred_check_branch
    %8 = sbr.rel (0) target = $region5
  $region4: #{mse_loss.1} parent=0 // pred_region
    %s9 = sadd.s32 0, 0
    %p10 = scmp.lt.s32.totalorder %s9, 0
    %s11 = scalar_select %p10, %s9, 0
    %s12 = smul.u32 2, %s11
    %p13 = scmp.lt.s32.totalorder %s12, 1
    %s14 = scalar_select %p13, %s12, 1
    %s15 = smul.addr %s14, 8
    %s16 = scalar_lea.vmem %s0, %s15
    %s17 = sadd.s32 0, 0
    %p18 = scmp.lt.s32.totalorder %s17, 0
    %s19 = scalar_select %p18, %s17, 0
    %s20 = smul.u32 2, %s19
  $region5: #{mse_loss.1} parent=0 // pred_fallthru
    _
  // Predicated region
  $region6: #{mse_loss.1} parent=0 // pred_check
    _
  $region7: #{mse_loss.1} parent=0 // pred_check_branch
    %22 = sbr.rel (0) target = $region9
  $region8: #{mse_loss.1} parent=0 // pred_region
    %s23 = sadd.s32 0, 0
    %p24 = scmp.lt.s32.totalorder %s23, 0
    %s25 = scalar_select %p24, %s23, 0
    %s26 = smul.u32 2, %s25
    %p27 = scmp.lt.s32.totalorder %s26, 1
    %s28 = scalar_select %p27, %s26, 1
    %s29 = smul.addr %s28, 8
    %s30 = scalar_lea.vmem %s1, %s29
    %s31 = sadd.s32 0, 0
    %p32 = scmp.lt.s32.totalorder %s31, 0
    %s33 = scalar_select %p32, %s31, 0
    %s34 = smul.u32 2, %s33
  $region9: #{mse_loss.1} parent=0 // pred_fallthru
    _
  %s35 = sadd.s32 0, 0
  %p36 = scmp.lt.s32.totalorder %s35, 0
  %s37 = scalar_select %p36, %s35, 0
  %s38 = smul.u32 2, %s37
  %p39 = scmp.lt.s32.totalorder %s38, 1
  %s40 = scalar_select %p39, %s38, 1
  %s41 = smul.addr %s40, 8
  %s42 = scalar_lea.vmem %s0, %s41
  %s43 = sadd.s32 0, 0
  %p44 = scmp.lt.s32.totalorder %s43, 0
  %s45 = scalar_select %p44, %s43, 0
  %s46 = smul.u32 2, %s45
  %p47 = scmp.lt.s32.totalorder %s46, 1
  %s48 = scalar_select %p47, %s46, 1
  %s49 = smul.addr %s48, 8
  %s50 = scalar_lea.vmem %s1, %s49
  %s51 = sadd.s32 0, 0
  %p52 = scmp.lt.s32.totalorder %s51, 0
  %s53 = scalar_select %p52, %s51, 0
  %s54 = smul.u32 2, %s53
  %p55 = scmp.lt.s32.totalorder %s54, 1
  %s56 = scalar_select %p55, %s54, 1
  %s57 = smul.addr %s56, 8
  %s58 = scalar_lea.vmem %s0, %s57
  %s59 = sadd.s32 0, 0
  %p60 = scmp.lt.s32.totalorder %s59, 0
  %s61 = scalar_select %p60, %s59, 0
  %s62 = smul.u32 2, %s61
  %s63 = sadd.s32 0, 0
  %p64 = scmp.lt.s32.totalorder %s63, 0
  %s65 = scalar_select %p64, %s63, 0
  %s66 = smul.u32 2, %s65
  %p67 = scmp.lt.s32.totalorder %s66, 1
  %s68 = scalar_select %p67, %s66, 1
  %s69 = smul.addr %s68, 8
  %s70 = scalar_lea.vmem %s1, %s69
  %s71 = sadd.s32 0, 0
  %p72 = scmp.lt.s32.totalorder %s71, 0
  %s73 = scalar_select %p72, %s71, 0
  %s74 = smul.u32 2, %s73
  %p75 = scmp.eq.s32.totalorder 0, 0
  // Predicated region
  $region10: #{mse_loss.1} parent=0 // pred_check
    %p76 = pneg %p75
  $region11: #{mse_loss.1} parent=0 // pred_check_branch
    %78 = sbr.rel (%p76) target = $region13
  $region12: #{mse_loss.1} parent=0 // pred_region
    %79 = vst [vmem:[%s2] sm:$0xff] 0.0
  $region13: #{mse_loss.1} parent=0 // pred_fallthru
    _
  %v80 = vld [vmem:[%s58] sm:$0xff]
  %v81 = vld [vmem:[%s58 + $0x8] sm:$0xff]
  %v82 = vld [vmem:[%s70] sm:$0xff]
  %v83 = vld [vmem:[%s70 + $0x8] sm:$0xff]
  %v84 = vsub.f32 %v80, %v82
  %v85 = vsub.f32 %v81, %v83
  %v86 = vmul.f32 %v84, %v84
  %v87 = vmul.f32 %v85, %v85
  %v88 = vadd.f32 %v86, %v87
  %v89 = vld [vmem:[%s2] sm:$0xff]
  %v90 = vadd.f32 %v89, %v88
  %91 = vst [vmem:[%s2] sm:$0xff] %v90
  // Predicated region
  $region14: #{mse_loss.1} parent=0 // pred_check
    _
  $region15: #{mse_loss.1} parent=0 // pred_check_branch
    %93 = sbr.rel (0) target = $region17
  $region16: #{mse_loss.1} parent=0 // pred_region
    _
  $region17: #{mse_loss.1} parent=0 // pred_fallthru
    _
  // Predicated region
  $region18: #{mse_loss.1} parent=0 // pred_check
    _
  $region19: #{mse_loss.1} parent=0 // pred_check_branch
    %95 = sbr.rel (0) target = $region21
  $region20: #{mse_loss.1} parent=0 // pred_region
    _
  $region21: #{mse_loss.1} parent=0 // pred_fallthru
    _

</llo_original>
